<compile_context>
chip_gen: v7x
topology: tpu7x:2x2x1
jax: 0.10.0
libtpu: 0.0.40
codegen_flags: <defaults>
</compile_context>

<pallas_src>
import functools
import math

import jax
import jax.numpy as jnp
from jax.experimental import pallas as pl
from jax.experimental.pallas import tpu as pltpu


_TARGET_BLOCK_BYTES = 2 * 1024 * 1024  # ~2 MiB tiles amortize per-step overhead


def _eca_kernel(k_ref, x_ref, o_ref, *, c, inv_s):
    # k_ref: (3,) f32 conv taps in SMEM.
    # x_ref / o_ref: (T_r, S_pad) row tile; T_r is a multiple of 8 and of c.
    x = x_ref[...]
    xf = x.astype(jnp.float32)                                  # f32 accumulation

    # Global average pool over spatial positions (lane padding contributes
    # zeros to the sum; divide by the true h*w*t).
    z = jnp.sum(xf, axis=-1, keepdims=True) * inv_s             # (T_r, 1) f32

    tr = z.shape[0]
    # Tiles are batch-aligned, so (local row index) mod c == channel index.
    ch = jax.lax.broadcasted_iota(jnp.int32, (tr, 1), 0) % c

    k0 = k_ref[0]
    k1 = k_ref[1]
    k2 = k_ref[2]

    # 3-tap conv along channels via sublane rotations (XLU); mask the
    # wrap-around so channels 0 / c-1 see zero padding (this also covers
    # batch boundaries inside the tile and the tile edges).
    z_prev = pltpu.roll(z, shift=1, axis=0)                     # row i holds z[i-1]
    z_next = pltpu.roll(z, shift=tr - 1, axis=0)                # row i holds z[i+1]
    z_prev = jnp.where(ch == 0, 0.0, z_prev)
    z_next = jnp.where(ch == c - 1, 0.0, z_next)

    y = jax.nn.sigmoid(k0 * z_prev + k1 * z + k2 * z_next)      # (T_r, 1) f32

    # Scale path: a single multiply; cast only at the store.
    o_ref[...] = (x * y.astype(x.dtype)).astype(o_ref.dtype)


def eca_forward(x, conv_w):
    """x: (b, c, h, w, t). conv_w: (1, 1, 3, 3) Conv2d weight (no bias)."""
    b, c, h, w, t = x.shape
    s = h * w * t
    dtype = x.dtype

    # Only the middle row of the 3x3 kernel touches real data (input H == 1).
    taps = conv_w[0, 0, 1, :].astype(jnp.float32)               # (3,)

    # rows = b*c on sublanes, cols = h*w*t on lanes.
    rows = b * c
    x2 = x.reshape(rows, s)

    # Lane padding -> unmasked, lane-dense vst.
    s_pad = ((s + 127) // 128) * 128
    if s_pad != s:
        x2 = jnp.pad(x2, ((0, 0), (0, s_pad - s)))

    # Row tile: whole batches per tile (multiple of c) and full sublane groups
    # (multiple of 8); sized to ~_TARGET_BLOCK_BYTES so DMAs are large while
    # double-buffered in+out stays far below VMEM limits on v5e/v6e/v7x.
    unit = (8 * c) // math.gcd(8, c)                            # lcm(8, c)
    bytes_per_row = s_pad * jnp.dtype(dtype).itemsize
    target_rows = max(1, _TARGET_BLOCK_BYTES // bytes_per_row)
    units_total = -(-rows // unit)
    units_per_tile = max(1, min(units_total, target_rows // unit))
    t_r = unit * units_per_tile
    rows_pad = -(-rows // t_r) * t_r
    if rows_pad != rows:
        x2 = jnp.pad(x2, ((0, rows_pad - rows), (0, 0)))
    # TODO(synk): if a single (lcm(8, c), s_pad) tile ever exceeds VMEM (huge
    # c*h*w*t), fall back to an S-tiled two-phase reduce-then-scale grid.

    kernel = functools.partial(_eca_kernel, c=c, inv_s=1.0 / s)

    out = pl.pallas_call(
        kernel,
        out_shape=jax.ShapeDtypeStruct((rows_pad, s_pad), dtype),
        grid_spec=pltpu.PrefetchScalarGridSpec(
            num_scalar_prefetch=0,
            grid=(rows_pad // t_r,),
            in_specs=[
                pl.BlockSpec(memory_space=pltpu.MemorySpace.SMEM),   # conv taps
                pl.BlockSpec((t_r, s_pad), lambda i: (i, 0)),        # x row tile
            ],
            out_specs=pl.BlockSpec((t_r, s_pad), lambda i: (i, 0)),
        ),
        compiler_params=pltpu.CompilerParams(
            dimension_semantics=("parallel",),
            vmem_limit_bytes=48 * 1024 * 1024,
        ),
    )(taps, x2)

    return out[:rows, :s].reshape(b, c, h, w, t)


def _reference(x, conv_w):
    k = conv_w[0, 0, 1, :]
    y = jnp.mean(x, axis=(2, 3, 4))                             # (b, c)
    yp = jnp.pad(y, ((0, 0), (1, 1)))
    yc = k[0] * yp[:, :-2] + k[1] * yp[:, 1:-1] + k[2] * yp[:, 2:]
    sgm = jax.nn.sigmoid(yc)
    return x * sgm[:, :, None, None, None]


if __name__ == "__main__":
    key = jax.random.PRNGKey(0)
    kx, kw = jax.random.split(key)

    b, c, h, w, t = 2, 4, 16, 16, 8
    x = jax.random.normal(kx, (b, c, h, w, t), dtype=jnp.float32)

    # Conv2d(1,1,3,3,bias=False) weight, in PyTorch's default
    # kaiming_uniform(a=sqrt(5)) range: bound = 1/sqrt(fan_in) = 1/3.
    conv_w = jax.random.uniform(
        kw, (1, 1, 3, 3), dtype=jnp.float32, minval=-1.0 / 3.0, maxval=1.0 / 3.0
    )

    out = eca_forward(x, conv_w)
    out = jax.block_until_ready(out)

    ref = _reference(x, conv_w)
    assert out.shape == x.shape
    assert jnp.max(jnp.abs(out - ref)) < 1e-5

    print("KERNEL_OK")
</pallas_src>

<mosaic_0001>
module attributes {stable_mosaic.version = 11 : i64} {
  func.func @_eca_kernel(%arg0: i32, %arg1: memref<3xf32, #tpu.memory_space<smem>>, %arg2: memref<8x2048xf32, #tpu.memory_space<vmem>>, %arg3: memref<8x2048xf32, #tpu.memory_space<vmem>>) attributes {dimension_semantics = [#tpu.dimension_semantics<parallel>], iteration_bounds = array<i64: 1>, scalar_prefetch = 0 : i64, scratch_operands = 0 : i64, tpu.core_type = #tpu.core_type<tc>, window_params = [{transform_indices = @transform_0, window_bounds = array<i64: 3>}, {transform_indices = @transform_1, window_bounds = array<i64: 8, 2048>}, {transform_indices = @transform_2, window_bounds = array<i64: 8, 2048>}]} {
    %c0 = arith.constant 0 : index
    %c0_0 = arith.constant 0 : index
    %0 = vector.load %arg2[%c0, %c0_0] : memref<8x2048xf32, #tpu.memory_space<vmem>>, vector<8x2048xf32>
    %cst = arith.constant dense<0.000000e+00> : vector<8xf32>
    %1 = vector.multi_reduction <add>, %0, %cst [1] : vector<8x2048xf32> to vector<8xf32>
    %2 = vector.shape_cast %1 : vector<8xf32> to vector<8x1xf32>
    %cst_1 = arith.constant 4.8828125E-4 : f32
    %3 = vector.broadcast %cst_1 : f32 to vector<8x1xf32>
    %4 = arith.mulf %2, %3 : vector<8x1xf32>
    %5 = tpu.iota {dimensions = array<i32: 0>} : vector<8x1xi32>
    %c4_i32 = arith.constant 4 : i32
    %c0_i32 = arith.constant 0 : i32
    %6 = arith.cmpi eq, %c4_i32, %c0_i32 : i32
    %c1_i32 = arith.constant 1 : i32
    %7 = arith.select %6, %c1_i32, %c4_i32 : i32
    %8 = vector.broadcast %7 : i32 to vector<8x1xi32>
    %9 = arith.remsi %5, %8 : vector<8x1xi32>
    %c0_i32_2 = arith.constant 0 : i32
    %10 = vector.broadcast %c0_i32_2 : i32 to vector<8x1xi32>
    %11 = arith.cmpi ne, %9, %10 : vector<8x1xi32>
    %c0_i32_3 = arith.constant 0 : i32
    %12 = vector.broadcast %c0_i32_3 : i32 to vector<8x1xi32>
    %13 = arith.cmpi slt, %9, %12 : vector<8x1xi32>
    %c0_i32_4 = arith.constant 0 : i32
    %14 = arith.cmpi slt, %7, %c0_i32_4 : i32
    %15 = vector.broadcast %14 : i1 to vector<8x1xi1>
    %16 = vector.broadcast %15 : vector<8x1xi1> to vector<8x1xi1>
    %17 = arith.xori %13, %16 : vector<8x1xi1>
    %18 = arith.andi %17, %11 : vector<8x1xi1>
    %19 = vector.broadcast %7 : i32 to vector<8x1xi32>
    %20 = arith.addi %9, %19 : vector<8x1xi32>
    %21 = arith.select %18, %20, %9 : vector<8x1xi1>, vector<8x1xi32>
    %c0_5 = arith.constant 0 : index
    %22 = memref.load %arg1[%c0_5] : memref<3xf32, #tpu.memory_space<smem>>
    %c1 = arith.constant 1 : index
    %23 = memref.load %arg1[%c1] : memref<3xf32, #tpu.memory_space<smem>>
    %c2 = arith.constant 2 : index
    %24 = memref.load %arg1[%c2] : memref<3xf32, #tpu.memory_space<smem>>
    %c1_i32_6 = arith.constant 1 : i32
    %25 = tpu.dynamic_rotate %4 by %c1_i32_6 dim 0 : vector<8x1xf32>, i32 -> vector<8x1xf32>
    %c7_i32 = arith.constant 7 : i32
    %26 = tpu.dynamic_rotate %4 by %c7_i32 dim 0 : vector<8x1xf32>, i32 -> vector<8x1xf32>
    %c0_i32_7 = arith.constant 0 : i32
    %27 = vector.broadcast %c0_i32_7 : i32 to vector<8x1xi32>
    %28 = arith.cmpi eq, %21, %27 : vector<8x1xi32>
    %cst_8 = arith.constant 0.000000e+00 : f32
    %29 = vector.broadcast %cst_8 : f32 to vector<8x1xf32>
    %30 = arith.select %28, %29, %25 : vector<8x1xi1>, vector<8x1xf32>
    %c3_i32 = arith.constant 3 : i32
    %31 = vector.broadcast %c3_i32 : i32 to vector<8x1xi32>
    %32 = arith.cmpi eq, %21, %31 : vector<8x1xi32>
    %cst_9 = arith.constant 0.000000e+00 : f32
    %33 = vector.broadcast %cst_9 : f32 to vector<8x1xf32>
    %34 = arith.select %32, %33, %26 : vector<8x1xi1>, vector<8x1xf32>
    %35 = vector.broadcast %22 : f32 to vector<8x1xf32>
    %36 = arith.mulf %35, %30 : vector<8x1xf32>
    %37 = vector.broadcast %23 : f32 to vector<8x1xf32>
    %38 = arith.mulf %37, %4 : vector<8x1xf32>
    %39 = arith.addf %36, %38 : vector<8x1xf32>
    %40 = vector.broadcast %24 : f32 to vector<8x1xf32>
    %41 = arith.mulf %40, %34 : vector<8x1xf32>
    %42 = arith.addf %39, %41 : vector<8x1xf32>
    %43 = arith.negf %42 : vector<8x1xf32>
    %44 = math.exp %43 : vector<8x1xf32>
    %cst_10 = arith.constant 1.000000e+00 : f32
    %45 = vector.broadcast %cst_10 : f32 to vector<8x1xf32>
    %46 = arith.addf %45, %44 : vector<8x1xf32>
    %47 = arith.divf %45, %46 : vector<8x1xf32>
    %48 = vector.broadcast %47 : vector<8x1xf32> to vector<8x2048xf32>
    %49 = arith.mulf %0, %48 : vector<8x2048xf32>
    %c0_11 = arith.constant 0 : index
    %c0_12 = arith.constant 0 : index
    %50 = vector.load %arg3[%c0_11, %c0_12] : memref<8x2048xf32, #tpu.memory_space<vmem>>, vector<8x2048xf32>
    tpu.vector_store %arg3[%c0_11, %c0_12], %49 {strides = array<i32>} : memref<8x2048xf32, #tpu.memory_space<vmem>>, vector<8x2048xf32>,
    return
  }
  func.func @transform_0(%arg0: i32) -> i32 {
    %c0_i32 = arith.constant 0 : i32
    %c0_i32_0 = arith.constant 0 : i32
    return %c0_i32 : i32
  }
  func.func @transform_1(%arg0: i32) -> (i32, i32) {
    %c0_i32 = arith.constant 0 : i32
    %c0_i32_0 = arith.constant 0 : i32
    return %arg0, %c0_i32 : i32, i32
  }
  func.func @transform_2(%arg0: i32) -> (i32, i32) {
    %c0_i32 = arith.constant 0 : i32
    %c0_i32_0 = arith.constant 0 : i32
    return %arg0, %c0_i32 : i32, i32
  }
}

</mosaic_0001>

<llo_original>
// kernel: tpu_custom_call.1
$region0: #{tpu_custom_call.1}
  #allocation0 [shape = 'u32[]', space=smem, size = 0x4, offset = 0x4, fixed_abs, tag = 'smem constant byte address 0x4 - core index']
  #allocation1 [shape = 'u32[144,128]{1,0:T(1,128)}', space=vmem, size = 0x12000, scoped, tag = 'internal scratch']
  %s0 = inlined_call_operand.hbm [shape: f32[3], index: 0, kind: input, shape index: {}]
  %s1 = inlined_call_operand.hbm [shape: f32[8,2048], index: 1, kind: input, shape index: {}]
  %s2 = inlined_call_operand.hbm [shape: f32[8,2048], index: 2, kind: output, shape index: {}]
  %s3 = sld [smem:[#allocation0]]
  $region26: #{tpu_custom_call.1} parent=0
    _
  %s5 = ssub.s32 1, %s3
  %s6 = scalar_select 0, %s5, %s3
  $region1: #{tpu_custom_call.1} parent=0
    #allocation2 [shape = 'u8[512]{0}', space=smem, size = 0x200, scoped, tag = 'input window, operand 0, single buffered']
    #allocation3 [shape = 's32[1]{0}', space=sflag, size = 0x4, scoped, tag = 'scoped memory for tpu_custom_call.1']
    #allocation4 [shape = 's32[1]{0}', space=sflag, size = 0x4, scoped, tag = 'scoped memory for tpu_custom_call.1']
    #allocation5 [shape = 's32[1]{0}', space=sflag, size = 0x4, scoped, tag = 'scoped memory for tpu_custom_call.1']
    #allocation6 [shape = 'u8[65536]{0}', space=vmem, size = 0x10000, scoped, tag = 'input window, operand 1, single buffered']
    #allocation7 [shape = 'u8[65536]{0}', space=vmem, size = 0x10000, scoped, tag = 'output window, operand 0, single buffered']
    %7 = vsyncpa [#allocation5], 0
    %8 = vsyncpa [#allocation3], 0
    %9 = vsyncpa [#allocation4], 0
    // Predicated region
    $region2: #{tpu_custom_call.1} parent=1 // pred_check
      _
    $region3: #{tpu_custom_call.1} parent=1 // pred_check_branch
      %11 = sbr.rel (0) target = $region5
    $region4: #{tpu_custom_call.1} parent=1 // pred_region
      %s13 = ssub.s32 16, 16
      %14 = vsyncadd [#allocation5], %s13
      %17 = dma.hbm_to_smem %s0, 16, [#allocation2], [#allocation5]
    $region5: #{tpu_custom_call.1} parent=1 // pred_fallthru
      _
    // Predicated region
    $region6: #{tpu_custom_call.1} parent=1 // pred_check
      _
    $region7: #{tpu_custom_call.1} parent=1 // pred_check_branch
      %19 = sbr.rel (0) target = $region9
    $region8: #{tpu_custom_call.1} parent=1 // pred_region
      %s21 = ssub.s32 2048, 2048
      %22 = vsyncadd [#allocation3], %s21
      %s24 = sshll.u32 [#allocation6], 4
      %s25 = int_to_ptr.vmem [resolvable:$true] %s24
      %27 = dma.hbm_to_vmem [thread:$0]  %s1, 2048, %s25, [#allocation3]
    $region9: #{tpu_custom_call.1} parent=1 // pred_fallthru
      _
    // Predicated region
    $region10: #{tpu_custom_call.1} parent=1 // pred_check
      _
    $region11: #{tpu_custom_call.1} parent=1 // pred_check_branch
      %29 = sbr.rel (0) target = $region13
    $region12: #{tpu_custom_call.1} parent=1 // pred_region
      %30 = dma.done [#allocation5], 16
    $region13: #{tpu_custom_call.1} parent=1 // pred_fallthru
      _
    // Predicated region
    $region14: #{tpu_custom_call.1} parent=1 // pred_check
      _
    $region15: #{tpu_custom_call.1} parent=1 // pred_check_branch
      %32 = sbr.rel (0) target = $region17
    $region16: #{tpu_custom_call.1} parent=1 // pred_region
      %33 = dma.done [#allocation3], 2048
    $region17: #{tpu_custom_call.1} parent=1 // pred_fallthru
      _
    %34 = sfence
    %v35 = vld [vmem:[#allocation6] sm:$0xff]
    %v36 = vld [vmem:[#allocation6 + $0x8] sm:$0xff]
    %v37 = vld [vmem:[#allocation6 + $0x10] sm:$0xff]
    %v38 = vld [vmem:[#allocation6 + $0x18] sm:$0xff]
    %v39 = vld [vmem:[#allocation6 + $0x20] sm:$0xff]
    %v40 = vld [vmem:[#allocation6 + $0x28] sm:$0xff]
    %v41 = vld [vmem:[#allocation6 + $0x30] sm:$0xff]
    %v42 = vld [vmem:[#allocation6 + $0x38] sm:$0xff]
    %v43 = vld [vmem:[#allocation6 + $0x40] sm:$0xff]
    %v44 = vld [vmem:[#allocation6 + $0x48] sm:$0xff]
    %v45 = vld [vmem:[#allocation6 + $0x50] sm:$0xff]
    %v46 = vld [vmem:[#allocation6 + $0x58] sm:$0xff]
    %v47 = vld [vmem:[#allocation6 + $0x60] sm:$0xff]
    %v48 = vld [vmem:[#allocation6 + $0x68] sm:$0xff]
    %v49 = vld [vmem:[#allocation6 + $0x70] sm:$0xff]
    %v50 = vld [vmem:[#allocation6 + $0x78] sm:$0xff]
    %v51 = vadd.f32 %v35, %v36
    %v52 = vadd.f32 %v51, %v37
    %v53 = vadd.f32 %v52, %v38
    %v54 = vadd.f32 %v53, %v39
    %v55 = vadd.f32 %v54, %v40
    %v56 = vadd.f32 %v55, %v41
    %v57 = vadd.f32 %v56, %v42
    %v58 = vadd.f32 %v57, %v43
    %v59 = vadd.f32 %v58, %v44
    %v60 = vadd.f32 %v59, %v45
    %v61 = vadd.f32 %v60, %v46
    %v62 = vadd.f32 %v61, %v47
    %v63 = vadd.f32 %v62, %v48
    %v64 = vadd.f32 %v63, %v49
    %v65 = vadd.f32 %v64, %v50
    %66 = vadd.xlane.f32.xlu0 %v65
    %v67 = vpop.xlane.xlu0 %66
    %v68 = vmul.f32 %v67, 0.00048828125
    %v69 = vlaneseq
    %v70 = vshrl.u32 %v69, 7
    %vm71 = vcmp.lt.s32.totalorder %v70, 0
    %v72 = vsub.s32 0, %v70
    %v73 = vsel %vm71, %v72, %v70
    %v74 = vshrl.u32 %v73, 2
    %v75 = vand.u32 %v73, 3
    %v76 = vsub.s32 0, %v75
    %v77 = vsel %vm71, %v76, %v75
    %vm78 = vcmp.ne.s32.totalorder %v77, 0
    %vm79 = vcmp.lt.s32.totalorder %v77, 0
    %vm80 = vmand %vm79, %vm78
    %v81 = vadd.s32 %v77, 4
    %v82 = vsel %vm80, %v81, %v77
    %s83 = sld [smem:[#allocation2]]
    %s84 = sld [smem:[#allocation2 + $0x1]]
    %s85 = sld [smem:[#allocation2 + $0x2]]
    %v86 = vrot.slane %v68, 7
    %v87 = vrot.slane %v68, 1
    %vm88 = vcmp.eq.s32.totalorder %v82, 0
    %v89 = vsel %vm88, 0.0, %v86
    %vm90 = vcmp.eq.s32.totalorder %v82, 3
    %v91 = vsel %vm90, 0.0, %v87
    %v92 = vstv %s83
    %v93 = vmul.f32 %v92, %v89
    %v94 = vstv %s84
    %v95 = vmul.f32 %v94, %v68
    %v96 = vadd.f32 %v93, %v95
    %v97 = vstv %s85
    %v98 = vmul.f32 %v97, %v91
    %v99 = vadd.f32 %v96, %v98
    %v100 = vxor.u32 %v99, 2147483648
    %v101 = vmul.f32 %v100, 1.442695
    %v102 = vpow.pop %v101
    %v103 = vadd.f32 %v102, 1.0
    %v104 = vrcp.pop %v103
    %v105 = vmul.f32 1.0, %v104
    %107 = vset.pattern.permute.xlu0 0
    %108 = vperm.xlu0 %107, %v105
    %v109 = vpop.permute.xlu0 %108
    %v111 = vmul.f32 %v35, %v109
    %v112 = vmul.f32 %v36, %v109
    %v113 = vmul.f32 %v37, %v109
    %v114 = vmul.f32 %v38, %v109
    %v115 = vmul.f32 %v39, %v109
    %v116 = vmul.f32 %v40, %v109
    %v117 = vmul.f32 %v41, %v109
    %v118 = vmul.f32 %v42, %v109
    %v119 = vmul.f32 %v43, %v109
    %v120 = vmul.f32 %v44, %v109
    %v121 = vmul.f32 %v45, %v109
    %v122 = vmul.f32 %v46, %v109
    %v123 = vmul.f32 %v47, %v109
    %v124 = vmul.f32 %v48, %v109
    %v125 = vmul.f32 %v49, %v109
    %v126 = vmul.f32 %v50, %v109
    %127 = vst [vmem:[#allocation7] sm:$0xff] %v111
    %128 = vst [vmem:[#allocation7 + $0x8] sm:$0xff] %v112
    %129 = vst [vmem:[#allocation7 + $0x10] sm:$0xff] %v113
    %130 = vst [vmem:[#allocation7 + $0x18] sm:$0xff] %v114
    %131 = vst [vmem:[#allocation7 + $0x20] sm:$0xff] %v115
    %132 = vst [vmem:[#allocation7 + $0x28] sm:$0xff] %v116
    %133 = vst [vmem:[#allocation7 + $0x30] sm:$0xff] %v117
    %134 = vst [vmem:[#allocation7 + $0x38] sm:$0xff] %v118
    %135 = vst [vmem:[#allocation7 + $0x40] sm:$0xff] %v119
    %136 = vst [vmem:[#allocation7 + $0x48] sm:$0xff] %v120
    %137 = vst [vmem:[#allocation7 + $0x50] sm:$0xff] %v121
    %138 = vst [vmem:[#allocation7 + $0x58] sm:$0xff] %v122
    %139 = vst [vmem:[#allocation7 + $0x60] sm:$0xff] %v123
    %140 = vst [vmem:[#allocation7 + $0x68] sm:$0xff] %v124
    %141 = vst [vmem:[#allocation7 + $0x70] sm:$0xff] %v125
    %142 = vst [vmem:[#allocation7 + $0x78] sm:$0xff] %v126
    // Predicated region
    $region18: #{tpu_custom_call.1} parent=1 // pred_check
      _
    $region19: #{tpu_custom_call.1} parent=1 // pred_check_branch
      %144 = sbr.rel (0) target = $region21
    $region20: #{tpu_custom_call.1} parent=1 // pred_region
      %s146 = ssub.s32 2048, 2048
      %147 = vsyncadd [#allocation4], %s146
      %s149 = sshll.u32 [#allocation7], 4
      %s150 = int_to_ptr.vmem [resolvable:$true] %s149
      %152 = dma.vmem_to_hbm [thread:$0]  %s150, 2048, %s2, [#allocation4]
    $region21: #{tpu_custom_call.1} parent=1 // pred_fallthru
      _
    // Predicated region
    $region22: #{tpu_custom_call.1} parent=1 // pred_check
      _
    $region23: #{tpu_custom_call.1} parent=1 // pred_check_branch
      %154 = sbr.rel (0) target = $region25
    $region24: #{tpu_custom_call.1} parent=1 // pred_region
      %155 = dma.done [#allocation4], 2048
    $region25: #{tpu_custom_call.1} parent=1 // pred_fallthru
      _
    %156 = vsyncpa [#allocation3], 1
    %157 = vsyncpa [#allocation4], 1
    %158 = vsyncpa [#allocation5], 1

</llo_original>
